<compile_context>
chip_gen: v7x
topology: tpu7x:2x2x1
jax: 0.10.0
libtpu: 0.0.40
codegen_flags: <defaults>
</compile_context>

<pallas_src>
import functools

import jax
import jax.numpy as jnp
from jax import lax
from jax.experimental import pallas as pl
from jax.experimental.pallas import tpu as pltpu


def _round_up(n, m):
    return ((n + m - 1) // m) * m


def _vmem_block_budget_bytes():
    """Budget for the pipelined (in + out) blocks.

    Conservative: fits inside the *default* scoped-VMEM window on every
    generation (v5e 16 MiB, v6e/v7x 32 MiB scoped; v7x physical is only
    64 MiB per TC), so vmem_limit_bytes never has to be raised.
    """
    try:
        phys = pltpu.get_tpu_info().vmem_capacity_bytes
    except Exception:  # pragma: no cover — conservative fallback (v7x per-TC)
        phys = 64 * 1024 * 1024
    return min(phys // 8, 8 * 1024 * 1024)


def _pick_time_chunk(T, bb, h_pad, in_itemsize, out_itemsize, max_chunk=512):
    """Largest divisor of T such that the double-buffered blocks fit VMEM."""
    budget = _vmem_block_budget_bytes()
    bytes_per_t = 2 * bb * h_pad * (in_itemsize + out_itemsize)  # 2x = dbl buf
    cap = max(1, budget // max(bytes_per_t, 1))
    tb = max(1, min(T, max_chunk, cap))
    while T % tb:
        tb -= 1
    return tb


def _rnn_chunk_kernel(xw_ref, whh_hbm, out_ref, whh_vmem, h_ref, dma_sem,
                      *, tb, n_chains):
    """One grid step == one (batch block, time chunk).

    xw_ref  : (TB, BB, Hp) VMEM  pre-projected input  x_t @ W_ih + b (time-major)
    whh_hbm : (Hp, Hp)     HBM   recurrent weight (copied once into whh_vmem)
    out_ref : (TB, BB, Hp) VMEM  per-step outputs (time-major)
    whh_vmem: (Hp, Hp)     VMEM  persistent copy of W_hh (no pipeline buffers)
    h_ref   : (BB, Hp)     VMEM  hidden state carried across time chunks
    """
    c = pl.program_id(1)  # time-chunk index (axis 0 is the batch block)

    @pl.when(c == 0)
    def _():
        # Copy W_hh into VMEM once per batch block; overlap with h init.
        cp = pltpu.make_async_copy(whh_hbm, whh_vmem, dma_sem)
        cp.start()
        # torch.zeros((batch, state_size)) initial hidden state.
        h_ref[...] = jnp.zeros_like(h_ref)
        cp.wait()

    w_hh = whh_vmem[...]
    bb = h_ref.shape[0]
    rows = bb // n_chains

    if n_chains == 1:
        h0 = (h_ref[...],)
    else:
        h0 = tuple(h_ref[pl.ds(i * rows, rows), :] for i in range(n_chains))

    def step(t, hs):
        xw_t = xw_ref[t]  # (BB, Hp)
        # Independent batch-half chains break the MXU -> VPU -> EUP serial
        # latency chain: chain A's tanh overlaps chain B's matmul drain.
        dots = tuple(
            jnp.dot(hs[i].astype(w_hh.dtype), w_hh,
                    preferred_element_type=jnp.float32)
            for i in range(n_chains))
        new_hs = []
        for i in range(n_chains):
            lo = i * rows
            h_i = jnp.tanh(xw_t[lo:lo + rows, :].astype(jnp.float32) + dots[i])
            if n_chains == 1:
                out_ref[t] = h_i.astype(out_ref.dtype)
            else:
                out_ref[t, pl.ds(lo, rows)] = h_i.astype(out_ref.dtype)
            new_hs.append(h_i)
        return tuple(new_hs)

    # Always (partially) unrolled so the scheduler sees across-step overlap.
    hs = lax.fori_loop(0, tb, step, h0, unroll=min(tb, 8))

    if n_chains == 1:
        h_ref[...] = hs[0]
    else:
        for i in range(n_chains):
            h_ref[pl.ds(i * rows, rows), :] = hs[i]


@functools.partial(jax.jit, static_argnames=("compute_dtype",))
def rnn_sequence(x, w_ih, w_hh, b, *, compute_dtype=jnp.float32):
    """x: (B, T, D) f32.  Returns outputs: (B, T, H) f32.

    compute_dtype: dtype fed to the MXU for h @ W_hh (and for the streamed xw
    blocks).  Use jnp.bfloat16 at real H on v6e/v7x; accumulation stays f32.
    """
    B, T, D = x.shape
    H = w_hh.shape[0]

    # Lane/sublane-dense padding: H -> multiple of 128 lanes, B -> multiple of
    # 8 sublanes (f32).  Zero padding is inert for this recurrence.
    B_pad = _round_up(B, 8)
    H_pad = _round_up(H, 128)

    # Hoisted, time-parallel input projection with the bias folded in, produced
    # directly in time-major layout so the in-loop work is just h @ W_hh + xw_t.
    xw = jnp.einsum("btd,dh->tbh", x, w_ih,
                    preferred_element_type=jnp.float32) + b          # (T,B,H)
    xw = jnp.pad(xw, ((0, 0), (0, B_pad - B), (0, H_pad - H)))
    xw = xw.astype(compute_dtype)                                    # (T,Bp,Hp)
    whh_p = jnp.pad(w_hh, ((0, H_pad - H), (0, H_pad - H))).astype(compute_dtype)

    # Batch blocks: split across TensorCores (v7x) only when each block keeps
    # >= 8 sublanes; within a block use 2 latency chains when rows >= 16.
    NB = 2 if (B_pad >= 16 and B_pad % 16 == 0) else 1
    BB = B_pad // NB
    n_chains = 2 if (BB >= 16 and BB % 16 == 0) else 1

    TB = _pick_time_chunk(T, BB, H_pad,
                          jnp.dtype(compute_dtype).itemsize, 4)
    NT = T // TB

    out_tm = pl.pallas_call(
        functools.partial(_rnn_chunk_kernel, tb=TB, n_chains=n_chains),
        out_shape=jax.ShapeDtypeStruct((T, B_pad, H_pad), jnp.float32),
        grid_spec=pltpu.PrefetchScalarGridSpec(
            num_scalar_prefetch=0,
            grid=(NB, NT),
            in_specs=[
                pl.BlockSpec((TB, BB, H_pad), lambda nb, c: (c, nb, 0)),  # xw
                pl.BlockSpec(memory_space=pl.ANY),                        # W_hh
            ],
            out_specs=pl.BlockSpec((TB, BB, H_pad), lambda nb, c: (c, nb, 0)),
            scratch_shapes=[
                pltpu.VMEM((H_pad, H_pad), compute_dtype),   # W_hh, single copy
                pltpu.VMEM((BB, H_pad), jnp.float32),         # hidden state
                pltpu.SemaphoreType.DMA(()),
            ],
        ),
        compiler_params=pltpu.CompilerParams(
            # batch blocks independent; time chunks sequential (carry h).
            dimension_semantics=("parallel", "arbitrary"),
        ),
    )(xw, whh_p)

    # Back to the PyTorch (B, T, H) convention and strip padding.
    return jnp.transpose(out_tm, (1, 0, 2))[:B, :, :H]


def _reference(x, w_ih, w_hh, b):
    """Pure-JAX reference of the same unrolled RNN, for validation."""
    B, _, _ = x.shape
    H = w_hh.shape[0]

    def step(h, x_t):
        h_new = jnp.tanh(x_t @ w_ih + h @ w_hh + b)
        return h_new, h_new

    h0 = jnp.zeros((B, H), jnp.float32)
    _, outs = lax.scan(step, h0, jnp.transpose(x, (1, 0, 2)))
    return jnp.transpose(outs, (1, 0, 2))


if __name__ == "__main__":
    B, T, D, H = 2, 8, 16, 32  # batch, seq_len, input_dim, rnn_cell.state_size

    key = jax.random.PRNGKey(0)
    kx, kw1, kw2, kb = jax.random.split(key, 4)

    x = jax.random.normal(kx, (B, T, D), dtype=jnp.float32)
    w_ih = jax.random.normal(kw1, (D, H), dtype=jnp.float32) * 0.1
    w_hh = jax.random.normal(kw2, (H, H), dtype=jnp.float32) * 0.1
    b = jax.random.normal(kb, (H,), dtype=jnp.float32) * 0.1

    out = jax.block_until_ready(rnn_sequence(x, w_ih, w_hh, b))

    ref = _reference(x, w_ih, w_hh, b)
    assert out.shape == (B, T, H)
    assert jnp.allclose(out, ref, atol=1e-5, rtol=1e-5)

    print("KERNEL_OK")
</pallas_src>

<mosaic_0001>
module attributes {stable_mosaic.version = 11 : i64} {
  func.func @_rnn_chunk_kernel(%arg0: i32, %arg1: i32, %arg2: memref<8x8x128xf32, #tpu.memory_space<vmem>>, %arg3: memref<128x128xf32, #tpu.memory_space<any>>, %arg4: memref<8x8x128xf32, #tpu.memory_space<vmem>>, %arg5: memref<128x128xf32, #tpu.memory_space<vmem>>, %arg6: memref<8x128xf32, #tpu.memory_space<vmem>>, %arg7: memref<!tpu.dma_semaphore, #tpu.memory_space<semaphore_mem>>) attributes {dimension_semantics = [#tpu.dimension_semantics<parallel>, #tpu.dimension_semantics<arbitrary>], iteration_bounds = array<i64: 1, 1>, scalar_prefetch = 0 : i64, scratch_operands = 3 : i64, tpu.core_type = #tpu.core_type<tc>, window_params = [{transform_indices = @transform_0, window_bounds = array<i64: 8, 8, 128>}, {}, {transform_indices = @transform_2, window_bounds = array<i64: 8, 8, 128>}]} {
    %c0_i32 = arith.constant 0 : i32
    %0 = arith.cmpi eq, %arg1, %c0_i32 : i32
    %1 = arith.extui %0 : i1 to i32
    %c0_i32_0 = arith.constant 0 : i32
    %2 = arith.cmpi ne, %1, %c0_i32_0 : i32
    scf.if %2 {
      tpu.enqueue_dma source(%arg3 : memref<128x128xf32, #tpu.memory_space<any>>) target(%arg5 : memref<128x128xf32, #tpu.memory_space<vmem>>) target_semaphore(%arg7 : memref<!tpu.dma_semaphore, #tpu.memory_space<semaphore_mem>>)
      %cst_46 = arith.constant 0.000000e+00 : f32
      %86 = vector.broadcast %cst_46 : f32 to vector<8x128xf32>
      %c0_47 = arith.constant 0 : index
      %c0_48 = arith.constant 0 : index
      %87 = vector.load %arg6[%c0_47, %c0_48] : memref<8x128xf32, #tpu.memory_space<vmem>>, vector<8x128xf32>
      tpu.vector_store %arg6[%c0_47, %c0_48], %86 {strides = array<i32>} : memref<8x128xf32, #tpu.memory_space<vmem>>, vector<8x128xf32>,
      tpu.wait_dma2 semaphore(%arg7 : memref<!tpu.dma_semaphore, #tpu.memory_space<semaphore_mem>>) src(%arg3 : memref<128x128xf32, #tpu.memory_space<any>>) dst(%arg5 : memref<128x128xf32, #tpu.memory_space<vmem>>)
    } else {
    }
    %c0 = arith.constant 0 : index
    %c0_1 = arith.constant 0 : index
    %3 = vector.load %arg5[%c0, %c0_1] : memref<128x128xf32, #tpu.memory_space<vmem>>, vector<128x128xf32>
    %c0_2 = arith.constant 0 : index
    %c0_3 = arith.constant 0 : index
    %4 = vector.load %arg6[%c0_2, %c0_3] : memref<8x128xf32, #tpu.memory_space<vmem>>, vector<8x128xf32>
    %c0_i32_4 = arith.constant 0 : i32
    %5 = arith.index_cast %c0_i32_4 : i32 to index
    %c0_5 = arith.constant 0 : index
    %c0_6 = arith.constant 0 : index
    %6 = vector.load %arg2[%5, %c0_5, %c0_6] : memref<8x8x128xf32, #tpu.memory_space<vmem>>, vector<1x8x128xf32>
    %7 = vector.shape_cast %6 : vector<1x8x128xf32> to vector<8x128xf32>
    %cst = arith.constant dense<0.000000e+00> : vector<8x128xf32>
    %8 = tpu.matmul %4, %3, %cst {dimension_numbers = #tpu.dot_dimension_numbers<[1], [0], [0], [1], [0, 0, 1, 1], [], []>} : vector<8x128xf32>, vector<128x128xf32>, vector<8x128xf32> -> vector<8x128xf32>
    %9 = arith.addf %7, %8 : vector<8x128xf32>
    %10 = math.tanh %9 : vector<8x128xf32>
    %11 = arith.index_cast %c0_i32_4 : i32 to index
    %c0_7 = arith.constant 0 : index
    %c0_8 = arith.constant 0 : index
    %12 = vector.load %arg4[%11, %c0_7, %c0_8] : memref<8x8x128xf32, #tpu.memory_space<vmem>>, vector<1x8x128xf32>
    %13 = vector.shape_cast %12 : vector<1x8x128xf32> to vector<8x128xf32>
    %14 = vector.shape_cast %10 : vector<8x128xf32> to vector<1x8x128xf32>
    tpu.vector_store %arg4[%11, %c0_7, %c0_8], %14 {strides = array<i32>} : memref<8x8x128xf32, #tpu.memory_space<vmem>>, vector<1x8x128xf32>,
    %c1_i32 = arith.constant 1 : i32
    %15 = arith.index_cast %c1_i32 : i32 to index
    %c0_9 = arith.constant 0 : index
    %c0_10 = arith.constant 0 : index
    %16 = vector.load %arg2[%15, %c0_9, %c0_10] : memref<8x8x128xf32, #tpu.memory_space<vmem>>, vector<1x8x128xf32>
    %17 = vector.shape_cast %16 : vector<1x8x128xf32> to vector<8x128xf32>
    %cst_11 = arith.constant dense<0.000000e+00> : vector<8x128xf32>
    %18 = tpu.matmul %10, %3, %cst_11 {dimension_numbers = #tpu.dot_dimension_numbers<[1], [0], [0], [1], [0, 0, 1, 1], [], []>} : vector<8x128xf32>, vector<128x128xf32>, vector<8x128xf32> -> vector<8x128xf32>
    %19 = arith.addf %17, %18 : vector<8x128xf32>
    %20 = math.tanh %19 : vector<8x128xf32>
    %21 = arith.index_cast %c1_i32 : i32 to index
    %c0_12 = arith.constant 0 : index
    %c0_13 = arith.constant 0 : index
    %22 = vector.load %arg4[%21, %c0_12, %c0_13] : memref<8x8x128xf32, #tpu.memory_space<vmem>>, vector<1x8x128xf32>
    %23 = vector.shape_cast %22 : vector<1x8x128xf32> to vector<8x128xf32>
    %24 = vector.shape_cast %20 : vector<8x128xf32> to vector<1x8x128xf32>
    tpu.vector_store %arg4[%21, %c0_12, %c0_13], %24 {strides = array<i32>} : memref<8x8x128xf32, #tpu.memory_space<vmem>>, vector<1x8x128xf32>,
    %c2_i32 = arith.constant 2 : i32
    %25 = arith.index_cast %c2_i32 : i32 to index
    %c0_14 = arith.constant 0 : index
    %c0_15 = arith.constant 0 : index
    %26 = vector.load %arg2[%25, %c0_14, %c0_15] : memref<8x8x128xf32, #tpu.memory_space<vmem>>, vector<1x8x128xf32>
    %27 = vector.shape_cast %26 : vector<1x8x128xf32> to vector<8x128xf32>
    %cst_16 = arith.constant dense<0.000000e+00> : vector<8x128xf32>
    %28 = tpu.matmul %20, %3, %cst_16 {dimension_numbers = #tpu.dot_dimension_numbers<[1], [0], [0], [1], [0, 0, 1, 1], [], []>} : vector<8x128xf32>, vector<128x128xf32>, vector<8x128xf32> -> vector<8x128xf32>
    %29 = arith.addf %27, %28 : vector<8x128xf32>
    %30 = math.tanh %29 : vector<8x128xf32>
    %31 = arith.index_cast %c2_i32 : i32 to index
    %c0_17 = arith.constant 0 : index
    %c0_18 = arith.constant 0 : index
    %32 = vector.load %arg4[%31, %c0_17, %c0_18] : memref<8x8x128xf32, #tpu.memory_space<vmem>>, vector<1x8x128xf32>
    %33 = vector.shape_cast %32 : vector<1x8x128xf32> to vector<8x128xf32>
    %34 = vector.shape_cast %30 : vector<8x128xf32> to vector<1x8x128xf32>
    tpu.vector_store %arg4[%31, %c0_17, %c0_18], %34 {strides = array<i32>} : memref<8x8x128xf32, #tpu.memory_space<vmem>>, vector<1x8x128xf32>,
    %c3_i32 = arith.constant 3 : i32
    %35 = arith.index_cast %c3_i32 : i32 to index
    %c0_19 = arith.constant 0 : index
    %c0_20 = arith.constant 0 : index
    %36 = vector.load %arg2[%35, %c0_19, %c0_20] : memref<8x8x128xf32, #tpu.memory_space<vmem>>, vector<1x8x128xf32>
    %37 = vector.shape_cast %36 : vector<1x8x128xf32> to vector<8x128xf32>
    %cst_21 = arith.constant dense<0.000000e+00> : vector<8x128xf32>
    %38 = tpu.matmul %30, %3, %cst_21 {dimension_numbers = #tpu.dot_dimension_numbers<[1], [0], [0], [1], [0, 0, 1, 1], [], []>} : vector<8x128xf32>, vector<128x128xf32>, vector<8x128xf32> -> vector<8x128xf32>
    %39 = arith.addf %37, %38 : vector<8x128xf32>
    %40 = math.tanh %39 : vector<8x128xf32>
    %41 = arith.index_cast %c3_i32 : i32 to index
    %c0_22 = arith.constant 0 : index
    %c0_23 = arith.constant 0 : index
    %42 = vector.load %arg4[%41, %c0_22, %c0_23] : memref<8x8x128xf32, #tpu.memory_space<vmem>>, vector<1x8x128xf32>
    %43 = vector.shape_cast %42 : vector<1x8x128xf32> to vector<8x128xf32>
    %44 = vector.shape_cast %40 : vector<8x128xf32> to vector<1x8x128xf32>
    tpu.vector_store %arg4[%41, %c0_22, %c0_23], %44 {strides = array<i32>} : memref<8x8x128xf32, #tpu.memory_space<vmem>>, vector<1x8x128xf32>,
    %c4_i32 = arith.constant 4 : i32
    %45 = arith.index_cast %c4_i32 : i32 to index
    %c0_24 = arith.constant 0 : index
    %c0_25 = arith.constant 0 : index
    %46 = vector.load %arg2[%45, %c0_24, %c0_25] : memref<8x8x128xf32, #tpu.memory_space<vmem>>, vector<1x8x128xf32>
    %47 = vector.shape_cast %46 : vector<1x8x128xf32> to vector<8x128xf32>
    %cst_26 = arith.constant dense<0.000000e+00> : vector<8x128xf32>
    %48 = tpu.matmul %40, %3, %cst_26 {dimension_numbers = #tpu.dot_dimension_numbers<[1], [0], [0], [1], [0, 0, 1, 1], [], []>} : vector<8x128xf32>, vector<128x128xf32>, vector<8x128xf32> -> vector<8x128xf32>
    %49 = arith.addf %47, %48 : vector<8x128xf32>
    %50 = math.tanh %49 : vector<8x128xf32>
    %51 = arith.index_cast %c4_i32 : i32 to index
    %c0_27 = arith.constant 0 : index
    %c0_28 = arith.constant 0 : index
    %52 = vector.load %arg4[%51, %c0_27, %c0_28] : memref<8x8x128xf32, #tpu.memory_space<vmem>>, vector<1x8x128xf32>
    %53 = vector.shape_cast %52 : vector<1x8x128xf32> to vector<8x128xf32>
    %54 = vector.shape_cast %50 : vector<8x128xf32> to vector<1x8x128xf32>
    tpu.vector_store %arg4[%51, %c0_27, %c0_28], %54 {strides = array<i32>} : memref<8x8x128xf32, #tpu.memory_space<vmem>>, vector<1x8x128xf32>,
    %c5_i32 = arith.constant 5 : i32
    %55 = arith.index_cast %c5_i32 : i32 to index
    %c0_29 = arith.constant 0 : index
    %c0_30 = arith.constant 0 : index
    %56 = vector.load %arg2[%55, %c0_29, %c0_30] : memref<8x8x128xf32, #tpu.memory_space<vmem>>, vector<1x8x128xf32>
    %57 = vector.shape_cast %56 : vector<1x8x128xf32> to vector<8x128xf32>
    %cst_31 = arith.constant dense<0.000000e+00> : vector<8x128xf32>
    %58 = tpu.matmul %50, %3, %cst_31 {dimension_numbers = #tpu.dot_dimension_numbers<[1], [0], [0], [1], [0, 0, 1, 1], [], []>} : vector<8x128xf32>, vector<128x128xf32>, vector<8x128xf32> -> vector<8x128xf32>
    %59 = arith.addf %57, %58 : vector<8x128xf32>
    %60 = math.tanh %59 : vector<8x128xf32>
    %61 = arith.index_cast %c5_i32 : i32 to index
    %c0_32 = arith.constant 0 : index
    %c0_33 = arith.constant 0 : index
    %62 = vector.load %arg4[%61, %c0_32, %c0_33] : memref<8x8x128xf32, #tpu.memory_space<vmem>>, vector<1x8x128xf32>
    %63 = vector.shape_cast %62 : vector<1x8x128xf32> to vector<8x128xf32>
    %64 = vector.shape_cast %60 : vector<8x128xf32> to vector<1x8x128xf32>
    tpu.vector_store %arg4[%61, %c0_32, %c0_33], %64 {strides = array<i32>} : memref<8x8x128xf32, #tpu.memory_space<vmem>>, vector<1x8x128xf32>,
    %c6_i32 = arith.constant 6 : i32
    %65 = arith.index_cast %c6_i32 : i32 to index
    %c0_34 = arith.constant 0 : index
    %c0_35 = arith.constant 0 : index
    %66 = vector.load %arg2[%65, %c0_34, %c0_35] : memref<8x8x128xf32, #tpu.memory_space<vmem>>, vector<1x8x128xf32>
    %67 = vector.shape_cast %66 : vector<1x8x128xf32> to vector<8x128xf32>
    %cst_36 = arith.constant dense<0.000000e+00> : vector<8x128xf32>
    %68 = tpu.matmul %60, %3, %cst_36 {dimension_numbers = #tpu.dot_dimension_numbers<[1], [0], [0], [1], [0, 0, 1, 1], [], []>} : vector<8x128xf32>, vector<128x128xf32>, vector<8x128xf32> -> vector<8x128xf32>
    %69 = arith.addf %67, %68 : vector<8x128xf32>
    %70 = math.tanh %69 : vector<8x128xf32>
    %71 = arith.index_cast %c6_i32 : i32 to index
    %c0_37 = arith.constant 0 : index
    %c0_38 = arith.constant 0 : index
    %72 = vector.load %arg4[%71, %c0_37, %c0_38] : memref<8x8x128xf32, #tpu.memory_space<vmem>>, vector<1x8x128xf32>
    %73 = vector.shape_cast %72 : vector<1x8x128xf32> to vector<8x128xf32>
    %74 = vector.shape_cast %70 : vector<8x128xf32> to vector<1x8x128xf32>
    tpu.vector_store %arg4[%71, %c0_37, %c0_38], %74 {strides = array<i32>} : memref<8x8x128xf32, #tpu.memory_space<vmem>>, vector<1x8x128xf32>,
    %c7_i32 = arith.constant 7 : i32
    %75 = arith.index_cast %c7_i32 : i32 to index
    %c0_39 = arith.constant 0 : index
    %c0_40 = arith.constant 0 : index
    %76 = vector.load %arg2[%75, %c0_39, %c0_40] : memref<8x8x128xf32, #tpu.memory_space<vmem>>, vector<1x8x128xf32>
    %77 = vector.shape_cast %76 : vector<1x8x128xf32> to vector<8x128xf32>
    %cst_41 = arith.constant dense<0.000000e+00> : vector<8x128xf32>
    %78 = tpu.matmul %70, %3, %cst_41 {dimension_numbers = #tpu.dot_dimension_numbers<[1], [0], [0], [1], [0, 0, 1, 1], [], []>} : vector<8x128xf32>, vector<128x128xf32>, vector<8x128xf32> -> vector<8x128xf32>
    %79 = arith.addf %77, %78 : vector<8x128xf32>
    %80 = math.tanh %79 : vector<8x128xf32>
    %81 = arith.index_cast %c7_i32 : i32 to index
    %c0_42 = arith.constant 0 : index
    %c0_43 = arith.constant 0 : index
    %82 = vector.load %arg4[%81, %c0_42, %c0_43] : memref<8x8x128xf32, #tpu.memory_space<vmem>>, vector<1x8x128xf32>
    %83 = vector.shape_cast %82 : vector<1x8x128xf32> to vector<8x128xf32>
    %84 = vector.shape_cast %80 : vector<8x128xf32> to vector<1x8x128xf32>
    tpu.vector_store %arg4[%81, %c0_42, %c0_43], %84 {strides = array<i32>} : memref<8x8x128xf32, #tpu.memory_space<vmem>>, vector<1x8x128xf32>,
    %c8_i32 = arith.constant 8 : i32
    %c0_44 = arith.constant 0 : index
    %c0_45 = arith.constant 0 : index
    %85 = vector.load %arg6[%c0_44, %c0_45] : memref<8x128xf32, #tpu.memory_space<vmem>>, vector<8x128xf32>
    tpu.vector_store %arg6[%c0_44, %c0_45], %80 {strides = array<i32>} : memref<8x128xf32, #tpu.memory_space<vmem>>, vector<8x128xf32>,
    return
  }
  func.func @transform_0(%arg0: i32, %arg1: i32) -> (i32, i32, i32) {
    %c0_i32 = arith.constant 0 : i32
    %c0_i32_0 = arith.constant 0 : i32
    return %arg1, %arg0, %c0_i32 : i32, i32, i32
  }
  func.func @transform_2(%arg0: i32, %arg1: i32) -> (i32, i32, i32) {
    %c0_i32 = arith.constant 0 : i32
    %c0_i32_0 = arith.constant 0 : i32
    return %arg1, %arg0, %c0_i32 : i32, i32, i32
  }
}

</mosaic_0001>

<llo_original>
// kernel: rnn_sequence.1
$region0: #{rnn_sequence.1}
  #allocation0 [shape = 'u32[]', space=smem, size = 0x4, offset = 0x4, fixed_abs, tag = 'smem constant byte address 0x4 - core index']
  #allocation1 [shape = 'u32[144,128]{1,0:T(1,128)}', space=vmem, size = 0x12000, scoped, tag = 'internal scratch']
  #allocation2 [shape = 'f32[128,128]{1,0:T(8,128)}', space=vmem, size = 0x10000, scoped, tag = 'scratch operand']
  #allocation3 [shape = 'f32[8,128]{1,0:T(8,128)}', space=vmem, size = 0x1000, scoped, tag = 'scratch operand']
  #allocation4 [shape = 's32[1]{0}', space=sflag, size = 0x4, scoped, tag = 'scratch operand']
  #allocation5 [shape = 's32[]', space=sflag, size = 0x4, offset = 0, fixed_abs, tag = 'sflag constant byte address 0x0 - dummy sync flag']
  %s0 = inlined_call_operand.vmem [shape: f32[8,8,128], index: 0, kind: input, shape index: {}]
  %s1 = inlined_call_operand.vmem [shape: f32[128,128], index: 1, kind: input, shape index: {}]
  %s2 = inlined_call_operand.vmem [shape: f32[8,8,128], index: 2, kind: output, shape index: {}]
  %s3 = sld [smem:[#allocation0]]
  $region52: #{rnn_sequence.1} parent=0
    _
  %s5 = ssub.s32 1, %s3
  %s6 = scalar_select 0, %s5, %s3
  // Predicated region
  $region2: #{rnn_sequence.1} parent=0 // pred_check
    _
  $region3: #{rnn_sequence.1} parent=0 // pred_check_branch
    %8 = sbr.rel (0) target = $region5
  $region4: #{rnn_sequence.1} parent=0 // pred_region
    _
  $region5: #{rnn_sequence.1} parent=0 // pred_fallthru
    _
  %p9 = scmp.eq.s32.totalorder 0, 0
  // Predicated region
  $region6: #{rnn_sequence.1} parent=0 // pred_check
    %p10 = pneg %p9
  $region7: #{rnn_sequence.1} parent=0 // pred_check_branch
    %12 = sbr.rel (%p10) target = $region9
  $region8: #{rnn_sequence.1} parent=0 // pred_region
    %p14 = scmp.lt.u32.totalorder 128, 8
    %p15 = pneg %p14
    // Predicated region
    $region10: #{rnn_sequence.1} parent=8 // pred_check
      _
    $region11: #{rnn_sequence.1} parent=8 // pred_check_branch
      %17 = sbr.rel (%p14) target = $region13
    $region12: #{rnn_sequence.1} parent=8 // pred_region
      %s32 = sand.u32 128, 7
      %p33 = scmp.eq.s32.totalorder %s32, 0
      // Predicated region
      $region25: #{rnn_sequence.1} parent=12 // pred_check
        %p34 = pneg %p33
      $region26: #{rnn_sequence.1} parent=12 // pred_check_branch
        %36 = sbr.rel (%p34) target = $region28
      $region27: #{rnn_sequence.1} parent=12 // pred_region
        loop: start=0, step=1, limit=1
        $region29: #{rnn_sequence.1} parent=27 // loop_pre_header
          _
        $region30: #{rnn_sequence.1} parent=27 // loop_header
          %s38 = sphi 0, %s42
          %p39 = scmp.ge.s32.totalorder %s38, 1
          %s43 = sphi %s1, %s1
          %s44 = sphi [#allocation2], [#allocation2]
        $region31: #{rnn_sequence.1} parent=27 // loop_header_branch
          %41 = sbr.rel (%p39) target = $region35
        $region32: #{rnn_sequence.1} parent=27 // loop_body
          %v45 = vld [vmem:[%s43] sm:$0xff]
          %46 = vst [vmem:[%s44] sm:$0xff] %v45
          %v47 = vld [vmem:[%s43 + $0x8] sm:$0xff]
          %48 = vst [vmem:[%s44 + $0x8] sm:$0xff] %v47
          %v49 = vld [vmem:[%s43 + $0x10] sm:$0xff]
          %50 = vst [vmem:[%s44 + $0x10] sm:$0xff] %v49
          %v51 = vld [vmem:[%s43 + $0x18] sm:$0xff]
          %52 = vst [vmem:[%s44 + $0x18] sm:$0xff] %v51
          %v53 = vld [vmem:[%s43 + $0x20] sm:$0xff]
          %54 = vst [vmem:[%s44 + $0x20] sm:$0xff] %v53
          %v55 = vld [vmem:[%s43 + $0x28] sm:$0xff]
          %56 = vst [vmem:[%s44 + $0x28] sm:$0xff] %v55
          %v57 = vld [vmem:[%s43 + $0x30] sm:$0xff]
          %58 = vst [vmem:[%s44 + $0x30] sm:$0xff] %v57
          %v59 = vld [vmem:[%s43 + $0x38] sm:$0xff]
          %60 = vst [vmem:[%s44 + $0x38] sm:$0xff] %v59
          %v61 = vld [vmem:[%s43 + $0x40] sm:$0xff]
          %62 = vst [vmem:[%s44 + $0x40] sm:$0xff] %v61
          %v63 = vld [vmem:[%s43 + $0x48] sm:$0xff]
          %64 = vst [vmem:[%s44 + $0x48] sm:$0xff] %v63
          %v65 = vld [vmem:[%s43 + $0x50] sm:$0xff]
          %66 = vst [vmem:[%s44 + $0x50] sm:$0xff] %v65
          %v67 = vld [vmem:[%s43 + $0x58] sm:$0xff]
          %68 = vst [vmem:[%s44 + $0x58] sm:$0xff] %v67
          %v69 = vld [vmem:[%s43 + $0x60] sm:$0xff]
          %70 = vst [vmem:[%s44 + $0x60] sm:$0xff] %v69
          %v71 = vld [vmem:[%s43 + $0x68] sm:$0xff]
          %72 = vst [vmem:[%s44 + $0x68] sm:$0xff] %v71
          %v73 = vld [vmem:[%s43 + $0x70] sm:$0xff]
          %74 = vst [vmem:[%s44 + $0x70] sm:$0xff] %v73
          %v75 = vld [vmem:[%s43 + $0x78] sm:$0xff]
          %76 = vst [vmem:[%s44 + $0x78] sm:$0xff] %v75
        $region33: #{rnn_sequence.1} parent=27 // loop_footer
          %s42 = sadd.s32 1, %s38
        $region34: #{rnn_sequence.1} parent=27 // loop_footer_branch
          %37 = sbr.rel target = $region30
        $region35: #{rnn_sequence.1} parent=27 // loop_exit
          _
      $region28: #{rnn_sequence.1} parent=12 // pred_fallthru
        _
      %p77 = pneg %p33
      // Predicated region
      $region36: #{rnn_sequence.1} parent=12 // pred_check
        _
      $region37: #{rnn_sequence.1} parent=12 // pred_check_branch
        %79 = sbr.rel (%p33) target = $region39
      $region38: #{rnn_sequence.1} parent=12 // pred_region
        %s80 = sand.u32 128, 7
      $region39: #{rnn_sequence.1} parent=12 // pred_fallthru
        _
    $region13: #{rnn_sequence.1} parent=8 // pred_fallthru
      _
    // Predicated region
    $region14: #{rnn_sequence.1} parent=8 // pred_check
      %p18 = pneg %p14
    $region15: #{rnn_sequence.1} parent=8 // pred_check_branch
      %20 = sbr.rel (%p18) target = $region17
    $region16: #{rnn_sequence.1} parent=8 // pred_region
      %s21 = sshllo.u32 0, 128
      loop: start=0, step=1, limit=1
      $region18: #{rnn_sequence.1} parent=16 // loop_pre_header
        _
      $region19: #{rnn_sequence.1} parent=16 // loop_header
        %s23 = sphi 0, %s27
        %p24 = scmp.ge.s32.totalorder %s23, 1
        %s28 = sphi %s1, %s1
        %s29 = sphi [#allocation2], [#allocation2]
      $region20: #{rnn_sequence.1} parent=16 // loop_header_branch
        %26 = sbr.rel (%p24) target = $region24
      $region21: #{rnn_sequence.1} parent=16 // loop_body
        %v30 = vld [vmem:[%s28] sm:%s21]
        %31 = vst [vmem:[%s29] sm:%s21] %v30
      $region22: #{rnn_sequence.1} parent=16 // loop_footer
        %s27 = sadd.s32 1, %s23
      $region23: #{rnn_sequence.1} parent=16 // loop_footer_branch
        %22 = sbr.rel target = $region19
      $region24: #{rnn_sequence.1} parent=16 // loop_exit
        _
    $region17: #{rnn_sequence.1} parent=8 // pred_fallthru
      _
    // Predicated region
    $region40: #{rnn_sequence.1} parent=8 // pred_check
      _
    $region41: #{rnn_sequence.1} parent=8 // pred_check_branch
      %83 = sbr.rel (0) target = $region43
    $region42: #{rnn_sequence.1} parent=8 // pred_region
      %84 = vsyncadd [#allocation4], 2048
    $region43: #{rnn_sequence.1} parent=8 // pred_fallthru
      _
    %85 = vst [vmem:[#allocation3] sm:$0xff] 0.0
    %s86 = smul.u32 128, 1
    %s87 = sshll.u32 %s86, 4
    %88 = dma.done [#allocation4], %s87
  $region9: #{rnn_sequence.1} parent=0 // pred_fallthru
    _
  %v89 = vld [vmem:[#allocation2] sm:$0xff]
  %v90 = vld [vmem:[#allocation2 + $0x8] sm:$0xff]
  %v91 = vld [vmem:[#allocation2 + $0x10] sm:$0xff]
  %v92 = vld [vmem:[#allocation2 + $0x18] sm:$0xff]
  %v93 = vld [vmem:[#allocation2 + $0x20] sm:$0xff]
  %v94 = vld [vmem:[#allocation2 + $0x28] sm:$0xff]
  %v95 = vld [vmem:[#allocation2 + $0x30] sm:$0xff]
  %v96 = vld [vmem:[#allocation2 + $0x38] sm:$0xff]
  %v97 = vld [vmem:[#allocation2 + $0x40] sm:$0xff]
  %v98 = vld [vmem:[#allocation2 + $0x48] sm:$0xff]
  %v99 = vld [vmem:[#allocation2 + $0x50] sm:$0xff]
  %v100 = vld [vmem:[#allocation2 + $0x58] sm:$0xff]
  %v101 = vld [vmem:[#allocation2 + $0x60] sm:$0xff]
  %v102 = vld [vmem:[#allocation2 + $0x68] sm:$0xff]
  %v103 = vld [vmem:[#allocation2 + $0x70] sm:$0xff]
  %v104 = vld [vmem:[#allocation2 + $0x78] sm:$0xff]
  %v105 = vld [vmem:[#allocation3] sm:$0xff]
  %v106 = vld [vmem:[%s0] sm:$0xff]
  %107 = vmatprep.subr.mxu0 0.0
  %108 = vmatpush1.msra.mxu0 %v89
  %109 = vmatprep.subr.mxu0 0.0
  %110 = vmatpush1.msra.mxu0 %v90
  %111 = vmatprep.subr.mxu0 0.0
  %112 = vmatpush1.msra.mxu0 %v91
  %113 = vmatprep.subr.mxu0 0.0
  %114 = vmatpush1.msra.mxu0 %v92
  %115 = vmatprep.subr.mxu0 0.0
  %116 = vmatpush1.msra.mxu0 %v93
  %117 = vmatprep.subr.mxu0 0.0
  %118 = vmatpush1.msra.mxu0 %v94
  %119 = vmatprep.subr.mxu0 0.0
  %120 = vmatpush1.msra.mxu0 %v95
  %121 = vmatprep.subr.mxu0 0.0
  %122 = vmatpush1.msra.mxu0 %v96
  %123 = vmatprep.subr.mxu0 0.0
  %124 = vmatpush1.msra.mxu0 %v97
  %125 = vmatprep.subr.mxu0 0.0
  %126 = vmatpush1.msra.mxu0 %v98
  %127 = vmatprep.subr.mxu0 0.0
  %128 = vmatpush1.msra.mxu0 %v99
  %129 = vmatprep.subr.mxu0 0.0
  %130 = vmatpush1.msra.mxu0 %v100
  %131 = vmatprep.subr.mxu0 0.0
  %132 = vmatpush1.msra.mxu0 %v101
  %133 = vmatprep.subr.mxu0 0.0
  %134 = vmatpush1.msra.mxu0 %v102
  %135 = vmatprep.subr.mxu0 0.0
  %136 = vmatpush1.msra.mxu0 %v103
  %137 = vmatprep.subr.mxu0 0.0
  %138 = vmatpush1.msra.mxu0 %v104
  %139 = vmatprep.subr.mxu0 0.0
  %140 = vmatpush1.msra.mxu0 0.0
  %141 = vmatprep.subr.mxu0 0.0
  %142 = vmatpush1.msra.mxu0 0.0
  %143 = vmatprep.subr.mxu0 0.0
  %144 = vmatpush1.msra.mxu0 0.0
  %145 = vmatprep.subr.mxu0 0.0
  %146 = vmatpush1.msra.mxu0 0.0
  %147 = vmatprep.subr.mxu0 0.0
  %148 = vmatpush1.msra.mxu0 0.0
  %149 = vmatprep.subr.mxu0 0.0
  %150 = vmatpush1.msra.mxu0 0.0
  %151 = vmatprep.subr.mxu0 0.0
  %152 = vmatpush1.msra.mxu0 0.0
  %153 = vmatprep.subr.mxu0 0.0
  %154 = vmatpush1.msra.mxu0 0.0
  %155 = vmatprep.subr.mxu0 0.0
  %156 = vmatpush1.msra.mxu0 0.0
  %157 = vmatprep.subr.mxu0 0.0
  %158 = vmatpush1.msra.mxu0 0.0
  %159 = vmatprep.subr.mxu0 0.0
  %160 = vmatpush1.msra.mxu0 0.0
  %161 = vmatprep.subr.mxu0 0.0
  %162 = vmatpush1.msra.mxu0 0.0
  %163 = vmatprep.subr.mxu0 0.0
  %164 = vmatpush1.msra.mxu0 0.0
  %165 = vmatprep.subr.mxu0 0.0
  %166 = vmatpush1.msra.mxu0 0.0
  %167 = vmatprep.subr.mxu0 0.0
  %168 = vmatpush1.msra.mxu0 0.0
  %169 = vmatprep.subr.mxu0 0.0
  %170 = vmatpush1.msra.mxu0 0.0
  %171 = vmatprep.mubr.f32.mxu0 0.0
  %172 = vmatmul.mubr.f32.gmra.mrb[0].mxu0 %v105
  %v173 = vpop.f32.mrb[0].mxu0
  %v174 = vadd.f32 0.0, %v173
  %v175 = vpop.f32.mrb[0].mxu0
  %176 = vdwg.mxu0
  %v177 = vadd.f32 %v106, %v174
  %v178 = vtanh.pop %v177
  %179 = vst [vmem:[%s2] sm:$0xff] %v178
  %s180 = scalar_lea.vmem %s0, 8
  %v181 = vld [vmem:[%s180] sm:$0xff]
  %182 = vmatprep.subr.mxu0 0.0
  %183 = vmatpush1.msra.mxu0 %v89
  %184 = vmatprep.subr.mxu0 0.0
  %185 = vmatpush1.msra.mxu0 %v90
  %186 = vmatprep.subr.mxu0 0.0
  %187 = vmatpush1.msra.mxu0 %v91
  %188 = vmatprep.subr.mxu0 0.0
  %189 = vmatpush1.msra.mxu0 %v92
  %190 = vmatprep.subr.mxu0 0.0
  %191 = vmatpush1.msra.mxu0 %v93
  %192 = vmatprep.subr.mxu0 0.0
  %193 = vmatpush1.msra.mxu0 %v94
  %194 = vmatprep.subr.mxu0 0.0
  %195 = vmatpush1.msra.mxu0 %v95
  %196 = vmatprep.subr.mxu0 0.0
  %197 = vmatpush1.msra.mxu0 %v96
  %198 = vmatprep.subr.mxu0 0.0
  %199 = vmatpush1.msra.mxu0 %v97
  %200 = vmatprep.subr.mxu0 0.0
  %201 = vmatpush1.msra.mxu0 %v98
  %202 = vmatprep.subr.mxu0 0.0
  %203 = vmatpush1.msra.mxu0 %v99
  %204 = vmatprep.subr.mxu0 0.0
  %205 = vmatpush1.msra.mxu0 %v100
  %206 = vmatprep.subr.mxu0 0.0
  %207 = vmatpush1.msra.mxu0 %v101
  %208 = vmatprep.subr.mxu0 0.0
  %209 = vmatpush1.msra.mxu0 %v102
  %210 = vmatprep.subr.mxu0 0.0
  %211 = vmatpush1.msra.mxu0 %v103
  %212 = vmatprep.subr.mxu0 0.0
  %213 = vmatpush1.msra.mxu0 %v104
  %214 = vmatprep.subr.mxu0 0.0
  %215 = vmatpush1.msra.mxu0 0.0
  %216 = vmatprep.subr.mxu0 0.0
  %217 = vmatpush1.msra.mxu0 0.0
  %218 = vmatprep.subr.mxu0 0.0
  %219 = vmatpush1.msra.mxu0 0.0
  %220 = vmatprep.subr.mxu0 0.0
  %221 = vmatpush1.msra.mxu0 0.0
  %222 = vmatprep.subr.mxu0 0.0
  %223 = vmatpush1.msra.mxu0 0.0
  %224 = vmatprep.subr.mxu0 0.0
  %225 = vmatpush1.msra.mxu0 0.0
  %226 = vmatprep.subr.mxu0 0.0
  %227 = vmatpush1.msra.mxu0 0.0
  %228 = vmatprep.subr.mxu0 0.0
  %229 = vmatpush1.msra.mxu0 0.0
  %230 = vmatprep.subr.mxu0 0.0
  %231 = vmatpush1.msra.mxu0 0.0
  %232 = vmatprep.subr.mxu0 0.0
  %233 = vmatpush1.msra.mxu0 0.0
  %234 = vmatprep.subr.mxu0 0.0
  %235 = vmatpush1.msra.mxu0 0.0
  %236 = vmatprep.subr.mxu0 0.0
  %237 = vmatpush1.msra.mxu0 0.0
  %238 = vmatprep.subr.mxu0 0.0
  %239 = vmatpush1.msra.mxu0 0.0
  %240 = vmatprep.subr.mxu0 0.0
  %241 = vmatpush1.msra.mxu0 0.0
  %242 = vmatprep.subr.mxu0 0.0
  %243 = vmatpush1.msra.mxu0 0.0
  %244 = vmatprep.subr.mxu0 0.0
  %245 = vmatpush1.msra.mxu0 0.0
  %246 = vmatprep.mubr.f32.mxu0 0.0
  %247 = vmatmul.mubr.f32.gmra.mrb[0].mxu0 %v178
  %v248 = vpop.f32.mrb[0].mxu0
  %v249 = vadd.f32 0.0, %v248
  %v250 = vpop.f32.mrb[0].mxu0
  %251 = vdwg.mxu0
  %v252 = vadd.f32 %v181, %v249
  %v253 = vtanh.pop %v252
  %s254 = scalar_lea.vmem %s2, 8
  %255 = vst [vmem:[%s254] sm:$0xff] %v253
  %s256 = scalar_lea.vmem %s0, 16
  %v257 = vld [vmem:[%s256] sm:$0xff]
  %258 = vmatprep.subr.mxu0 0.0
  %259 = vmatpush1.msra.mxu0 %v89
  %260 = vmatprep.subr.mxu0 0.0
  %261 = vmatpush1.msra.mxu0 %v90
  %262 = vmatprep.subr.mxu0 0.0
  %263 = vmatpush1.msra.mxu0 %v91
  %264 = vmatprep.subr.mxu0 0.0
  %265 = vmatpush1.msra.mxu0 %v92
  %266 = vmatprep.subr.mxu0 0.0
  %267 = vmatpush1.msra.mxu0 %v93
  %268 = vmatprep.subr.mxu0 0.0
  %269 = vmatpush1.msra.mxu0 %v94
  %270 = vmatprep.subr.mxu0 0.0
  %271 = vmatpush1.msra.mxu0 %v95
  %272 = vmatprep.subr.mxu0 0.0
  %273 = vmatpush1.msra.mxu0 %v96
  %274 = vmatprep.subr.mxu0 0.0
  %275 = vmatpush1.msra.mxu0 %v97
  %276 = vmatprep.subr.mxu0 0.0
  %277 = vmatpush1.msra.mxu0 %v98
  %278 = vmatprep.subr.mxu0 0.0
  %279 = vmatpush1.msra.mxu0 %v99
  %280 = vmatprep.subr.mxu0 0.0
  %281 = vmatpush1.msra.mxu0 %v100
  %282 = vmatprep.subr.mxu0 0.0
  %283 = vmatpush1.msra.mxu0 %v101
  %284 = vmatprep.subr.mxu0 0.0
  %285 = vmatpush1.msra.mxu0 %v102
  %286 = vmatprep.subr.mxu0 0.0
  %287 = vmatpush1.msra.mxu0 %v103
  %288 = vmatprep.subr.mxu0 0.0
  %289 = vmatpush1.msra.mxu0 %v104
  %290 = vmatprep.subr.mxu0 0.0
  %291 = vmatpush1.msra.mxu0 0.0
  %292 = vmatprep.subr.mxu0 0.0
  %293 = vmatpush1.msra.mxu0 0.0
  %294 = vmatprep.subr.mxu0 0.0
  %295 = vmatpush1.msra.mxu0 0.0
  %296 = vmatprep.subr.mxu0 0.0
  %297 = vmatpush1.msra.mxu0 0.0
  %298 = vmatprep.subr.mxu0 0.0
  %299 = vmatpush1.msra.mxu0 0.0
  %300 = vmatprep.subr.mxu0 0.0
  %301 = vmatpush1.msra.mxu0 0.0
  %302 = vmatprep.subr.mxu0 0.0
  %303 = vmatpush1.msra.mxu0 0.0
  %304 = vmatprep.subr.mxu0 0.0
  %305 = vmatpush1.msra.mxu0 0.0
  %306 = vmatprep.subr.mxu0 0.0
  %307 = vmatpush1.msra.mxu0 0.0
  %308 = vmatprep.subr.mxu0 0.0
  %309 = vmatpush1.msra.mxu0 0.0
  %310 = vmatprep.subr.mxu0 0.0
  %311 = vmatpush1.msra.mxu0 0.0
  %312 = vmatprep.subr.mxu0 0.0
  %313 = vmatpush1.msra.mxu0 0.0
  %314 = vmatprep.subr.mxu0 0.0
  %315 = vmatpush1.msra.mxu0 0.0
  %316 = vmatprep.subr.mxu0 0.0
  %317 = vmatpush1.msra.mxu0 0.0
  %318 = vmatprep.subr.mxu0 0.0
  %319 = vmatpush1.msra.mxu0 0.0
  %320 = vmatprep.subr.mxu0 0.0
  %321 = vmatpush1.msra.mxu0 0.0
  %322 = vmatprep.mubr.f32.mxu0 0.0
  %323 = vmatmul.mubr.f32.gmra.mrb[0].mxu0 %v253
  %v324 = vpop.f32.mrb[0].mxu0
  %v325 = vadd.f32 0.0, %v324
  %v326 = vpop.f32.mrb[0].mxu0
  %327 = vdwg.mxu0
  %v328 = vadd.f32 %v257, %v325
  %v329 = vtanh.pop %v328
  %s330 = scalar_lea.vmem %s2, 16
  %331 = vst [vmem:[%s330] sm:$0xff] %v329
  %s332 = scalar_lea.vmem %s0, 24
  %v333 = vld [vmem:[%s332] sm:$0xff]
  %334 = vmatprep.subr.mxu0 0.0
  %335 = vmatpush1.msra.mxu0 %v89
  %336 = vmatprep.subr.mxu0 0.0
  %337 = vmatpush1.msra.mxu0 %v90
  %338 = vmatprep.subr.mxu0 0.0
  %339 = vmatpush1.msra.mxu0 %v91
  %340 = vmatprep.subr.mxu0 0.0
  %341 = vmatpush1.msra.mxu0 %v92
  %342 = vmatprep.subr.mxu0 0.0
  %343 = vmatpush1.msra.mxu0 %v93
  %344 = vmatprep.subr.mxu0 0.0
  %345 = vmatpush1.msra.mxu0 %v94
  %346 = vmatprep.subr.mxu0 0.0
  %347 = vmatpush1.msra.mxu0 %v95
  %348 = vmatprep.subr.mxu0 0.0
  %349 = vmatpush1.msra.mxu0 %v96
  %350 = vmatprep.subr.mxu0 0.0
  %351 = vmatpush1.msra.mxu0 %v97
  %352 = vmatprep.subr.mxu0 0.0
  %353 = vmatpush1.msra.mxu0 %v98
  %354 = vmatprep.subr.mxu0 0.0
  %355 = vmatpush1.msra.mxu0 %v99
  %356 = vmatprep.subr.mxu0 0.0
  %357 = vmatpush1.msra.mxu0 %v100
  %358 = vmatprep.subr.mxu0 0.0
  %359 = vmatpush1.msra.mxu0 %v101
  %360 = vmatprep.subr.mxu0 0.0
  %361 = vmatpush1.msra.mxu0 %v102
  %362 = vmatprep.subr.mxu0 0.0
  %363 = vmatpush1.msra.mxu0 %v103
  %364 = vmatprep.subr.mxu0 0.0
  %365 = vmatpush1.msra.mxu0 %v104
  %366 = vmatprep.subr.mxu0 0.0
  %367 = vmatpush1.msra.mxu0 0.0
  %368 = vmatprep.subr.mxu0 0.0
  %369 = vmatpush1.msra.mxu0 0.0
  %370 = vmatprep.subr.mxu0 0.0
  %371 = vmatpush1.msra.mxu0 0.0
  %372 = vmatprep.subr.mxu0 0.0
  %373 = vmatpush1.msra.mxu0 0.0
  %374 = vmatprep.subr.mxu0 0.0
  %375 = vmatpush1.msra.mxu0 0.0
  %376 = vmatprep.subr.mxu0 0.0
  %377 = vmatpush1.msra.mxu0 0.0
  %378 = vmatprep.subr.mxu0 0.0
  %379 = vmatpush1.msra.mxu0 0.0
  %380 = vmatprep.subr.mxu0 0.0
  %381 = vmatpush1.msra.mxu0 0.0
  %382 = vmatprep.subr.mxu0 0.0
  %383 = vmatpush1.msra.mxu0 0.0
  %384 = vmatprep.subr.mxu0 0.0
  %385 = vmatpush1.msra.mxu0 0.0
  %386 = vmatprep.subr.mxu0 0.0
  %387 = vmatpush1.msra.mxu0 0.0
  %388 = vmatprep.subr.mxu0 0.0
  %389 = vmatpush1.msra.mxu0 0.0
  %390 = vmatprep.subr.mxu0 0.0
  %391 = vmatpush1.msra.mxu0 0.0
  %392 = vmatprep.subr.mxu0 0.0
  %393 = vmatpush1.msra.mxu0 0.0
  %394 = vmatprep.subr.mxu0 0.0
  %395 = vmatpush1.msra.mxu0 0.0
  %396 = vmatprep.subr.mxu0 0.0
  %397 = vmatpush1.msra.mxu0 0.0
  %398 = vmatprep.mubr.f32.mxu0 0.0
  %399 = vmatmul.mubr.f32.gmra.mrb[0].mxu0 %v329
  %v400 = vpop.f32.mrb[0].mxu0
  %v401 = vadd.f32 0.0, %v400
  %v402 = vpop.f32.mrb[0].mxu0
  %403 = vdwg.mxu0
  %v404 = vadd.f32 %v333, %v401
  %v405 = vtanh.pop %v404
  %s406 = scalar_lea.vmem %s2, 24
  %407 = vst [vmem:[%s406] sm:$0xff] %v405
  %s408 = scalar_lea.vmem %s0, 32
  %v409 = vld [vmem:[%s408] sm:$0xff]
  %410 = vmatprep.subr.mxu0 0.0
  %411 = vmatpush1.msra.mxu0 %v89
  %412 = vmatprep.subr.mxu0 0.0
  %413 = vmatpush1.msra.mxu0 %v90
  %414 = vmatprep.subr.mxu0 0.0
  %415 = vmatpush1.msra.mxu0 %v91
  %416 = vmatprep.subr.mxu0 0.0
  %417 = vmatpush1.msra.mxu0 %v92
  %418 = vmatprep.subr.mxu0 0.0
  %419 = vmatpush1.msra.mxu0 %v93
  %420 = vmatprep.subr.mxu0 0.0
  %421 = vmatpush1.msra.mxu0 %v94
  %422 = vmatprep.subr.mxu0 0.0
  %423 = vmatpush1.msra.mxu0 %v95
  %424 = vmatprep.subr.mxu0 0.0
  %425 = vmatpush1.msra.mxu0 %v96
  %426 = vmatprep.subr.mxu0 0.0
  %427 = vmatpush1.msra.mxu0 %v97
  %428 = vmatprep.subr.mxu0 0.0
  %429 = vmatpush1.msra.mxu0 %v98
  %430 = vmatprep.subr.mxu0 0.0
  %431 = vmatpush1.msra.mxu0 %v99
  %432 = vmatprep.subr.mxu0 0.0
  %433 = vmatpush1.msra.mxu0 %v100
  %434 = vmatprep.subr.mxu0 0.0
  %435 = vmatpush1.msra.mxu0 %v101
  %436 = vmatprep.subr.mxu0 0.0
  %437 = vmatpush1.msra.mxu0 %v102
  %438 = vmatprep.subr.mxu0 0.0
  %439 = vmatpush1.msra.mxu0 %v103
  %440 = vmatprep.subr.mxu0 0.0
  %441 = vmatpush1.msra.mxu0 %v104
  %442 = vmatprep.subr.mxu0 0.0
  %443 = vmatpush1.msra.mxu0 0.0
  %444 = vmatprep.subr.mxu0 0.0
  %445 = vmatpush1.msra.mxu0 0.0
  %446 = vmatprep.subr.mxu0 0.0
  %447 = vmatpush1.msra.mxu0 0.0
  %448 = vmatprep.subr.mxu0 0.0
  %449 = vmatpush1.msra.mxu0 0.0
  %450 = vmatprep.subr.mxu0 0.0
  %451 = vmatpush1.msra.mxu0 0.0
  %452 = vmatprep.subr.mxu0 0.0
  %453 = vmatpush1.msra.mxu0 0.0
  %454 = vmatprep.subr.mxu0 0.0
  %455 = vmatpush1.msra.mxu0 0.0
  %456 = vmatprep.subr.mxu0 0.0
  %457 = vmatpush1.msra.mxu0 0.0
  %458 = vmatprep.subr.mxu0 0.0
  %459 = vmatpush1.msra.mxu0 0.0
  %460 = vmatprep.subr.mxu0 0.0
  %461 = vmatpush1.msra.mxu0 0.0
  %462 = vmatprep.subr.mxu0 0.0
  %463 = vmatpush1.msra.mxu0 0.0
  %464 = vmatprep.subr.mxu0 0.0
  %465 = vmatpush1.msra.mxu0 0.0
  %466 = vmatprep.subr.mxu0 0.0
  %467 = vmatpush1.msra.mxu0 0.0
  %468 = vmatprep.subr.mxu0 0.0
  %469 = vmatpush1.msra.mxu0 0.0
  %470 = vmatprep.subr.mxu0 0.0
  %471 = vmatpush1.msra.mxu0 0.0
  %472 = vmatprep.subr.mxu0 0.0
  %473 = vmatpush1.msra.mxu0 0.0
  %474 = vmatprep.mubr.f32.mxu0 0.0
  %475 = vmatmul.mubr.f32.gmra.mrb[0].mxu0 %v405
  %v476 = vpop.f32.mrb[0].mxu0
  %v477 = vadd.f32 0.0, %v476
  %v478 = vpop.f32.mrb[0].mxu0
  %479 = vdwg.mxu0
  %v480 = vadd.f32 %v409, %v477
  %v481 = vtanh.pop %v480
  %s482 = scalar_lea.vmem %s2, 32
  %483 = vst [vmem:[%s482] sm:$0xff] %v481
  %s484 = scalar_lea.vmem %s0, 40
  %v485 = vld [vmem:[%s484] sm:$0xff]
  %486 = vmatprep.subr.mxu0 0.0
  %487 = vmatpush1.msra.mxu0 %v89
  %488 = vmatprep.subr.mxu0 0.0
  %489 = vmatpush1.msra.mxu0 %v90
  %490 = vmatprep.subr.mxu0 0.0
  %491 = vmatpush1.msra.mxu0 %v91
  %492 = vmatprep.subr.mxu0 0.0
  %493 = vmatpush1.msra.mxu0 %v92
  %494 = vmatprep.subr.mxu0 0.0
  %495 = vmatpush1.msra.mxu0 %v93
  %496 = vmatprep.subr.mxu0 0.0
  %497 = vmatpush1.msra.mxu0 %v94
  %498 = vmatprep.subr.mxu0 0.0
  %499 = vmatpush1.msra.mxu0 %v95
  %500 = vmatprep.subr.mxu0 0.0
  %501 = vmatpush1.msra.mxu0 %v96
  %502 = vmatprep.subr.mxu0 0.0
  %503 = vmatpush1.msra.mxu0 %v97
  %504 = vmatprep.subr.mxu0 0.0
  %505 = vmatpush1.msra.mxu0 %v98
  %506 = vmatprep.subr.mxu0 0.0
  %507 = vmatpush1.msra.mxu0 %v99
  %508 = vmatprep.subr.mxu0 0.0
  %509 = vmatpush1.msra.mxu0 %v100
  %510 = vmatprep.subr.mxu0 0.0
  %511 = vmatpush1.msra.mxu0 %v101
  %512 = vmatprep.subr.mxu0 0.0
  %513 = vmatpush1.msra.mxu0 %v102
  %514 = vmatprep.subr.mxu0 0.0
  %515 = vmatpush1.msra.mxu0 %v103
  %516 = vmatprep.subr.mxu0 0.0
  %517 = vmatpush1.msra.mxu0 %v104
  %518 = vmatprep.subr.mxu0 0.0
  %519 = vmatpush1.msra.mxu0 0.0
  %520 = vmatprep.subr.mxu0 0.0
  %521 = vmatpush1.msra.mxu0 0.0
  %522 = vmatprep.subr.mxu0 0.0
  %523 = vmatpush1.msra.mxu0 0.0
  %524 = vmatprep.subr.mxu0 0.0
  %525 = vmatpush1.msra.mxu0 0.0
  %526 = vmatprep.subr.mxu0 0.0
  %527 = vmatpush1.msra.mxu0 0.0
  %528 = vmatprep.subr.mxu0 0.0
  %529 = vmatpush1.msra.mxu0 0.0
  %530 = vmatprep.subr.mxu0 0.0
  %531 = vmatpush1.msra.mxu0 0.0
  %532 = vmatprep.subr.mxu0 0.0
  %533 = vmatpush1.msra.mxu0 0.0
  %534 = vmatprep.subr.mxu0 0.0
  %535 = vmatpush1.msra.mxu0 0.0
  %536 = vmatprep.subr.mxu0 0.0
  %537 = vmatpush1.msra.mxu0 0.0
  %538 = vmatprep.subr.mxu0 0.0
  %539 = vmatpush1.msra.mxu0 0.0
  %540 = vmatprep.subr.mxu0 0.0
  %541 = vmatpush1.msra.mxu0 0.0
  %542 = vmatprep.subr.mxu0 0.0
  %543 = vmatpush1.msra.mxu0 0.0
  %544 = vmatprep.subr.mxu0 0.0
  %545 = vmatpush1.msra.mxu0 0.0
  %546 = vmatprep.subr.mxu0 0.0
  %547 = vmatpush1.msra.mxu0 0.0
  %548 = vmatprep.subr.mxu0 0.0
  %549 = vmatpush1.msra.mxu0 0.0
  %550 = vmatprep.mubr.f32.mxu0 0.0
  %551 = vmatmul.mubr.f32.gmra.mrb[0].mxu0 %v481
  %v552 = vpop.f32.mrb[0].mxu0
  %v553 = vadd.f32 0.0, %v552
  %v554 = vpop.f32.mrb[0].mxu0
  %555 = vdwg.mxu0
  %v556 = vadd.f32 %v485, %v553
  %v557 = vtanh.pop %v556
  %s558 = scalar_lea.vmem %s2, 40
  %559 = vst [vmem:[%s558] sm:$0xff] %v557
  %s560 = scalar_lea.vmem %s0, 48
  %v561 = vld [vmem:[%s560] sm:$0xff]
  %562 = vmatprep.subr.mxu0 0.0
  %563 = vmatpush1.msra.mxu0 %v89
  %564 = vmatprep.subr.mxu0 0.0
  %565 = vmatpush1.msra.mxu0 %v90
  %566 = vmatprep.subr.mxu0 0.0
  %567 = vmatpush1.msra.mxu0 %v91
  %568 = vmatprep.subr.mxu0 0.0
  %569 = vmatpush1.msra.mxu0 %v92
  %570 = vmatprep.subr.mxu0 0.0
  %571 = vmatpush1.msra.mxu0 %v93
  %572 = vmatprep.subr.mxu0 0.0
  %573 = vmatpush1.msra.mxu0 %v94
  %574 = vmatprep.subr.mxu0 0.0
  %575 = vmatpush1.msra.mxu0 %v95
  %576 = vmatprep.subr.mxu0 0.0
  %577 = vmatpush1.msra.mxu0 %v96
  %578 = vmatprep.subr.mxu0 0.0
  %579 = vmatpush1.msra.mxu0 %v97
  %580 = vmatprep.subr.mxu0 0.0
  %581 = vmatpush1.msra.mxu0 %v98
  %582 = vmatprep.subr.mxu0 0.0
  %583 = vmatpush1.msra.mxu0 %v99
  %584 = vmatprep.subr.mxu0 0.0
  %585 = vmatpush1.msra.mxu0 %v100
  %586 = vmatprep.subr.mxu0 0.0
  %587 = vmatpush1.msra.mxu0 %v101
  %588 = vmatprep.subr.mxu0 0.0
  %589 = vmatpush1.msra.mxu0 %v102
  %590 = vmatprep.subr.mxu0 0.0
  %591 = vmatpush1.msra.mxu0 %v103
  %592 = vmatprep.subr.mxu0 0.0
  %593 = vmatpush1.msra.mxu0 %v104
  %594 = vmatprep.subr.mxu0 0.0
  %595 = vmatpush1.msra.mxu0 0.0
  %596 = vmatprep.subr.mxu0 0.0
  %597 = vmatpush1.msra.mxu0 0.0
  %598 = vmatprep.subr.mxu0 0.0
  %599 = vmatpush1.msra.mxu0 0.0
  %600 = vmatprep.subr.mxu0 0.0
  %601 = vmatpush1.msra.mxu0 0.0
  %602 = vmatprep.subr.mxu0 0.0
  %603 = vmatpush1.msra.mxu0 0.0
  %604 = vmatprep.subr.mxu0 0.0
  %605 = vmatpush1.msra.mxu0 0.0
  %606 = vmatprep.subr.mxu0 0.0
  %607 = vmatpush1.msra.mxu0 0.0
  %608 = vmatprep.subr.mxu0 0.0
  %609 = vmatpush1.msra.mxu0 0.0
  %610 = vmatprep.subr.mxu0 0.0
  %611 = vmatpush1.msra.mxu0 0.0
  %612 = vmatprep.subr.mxu0 0.0
  %613 = vmatpush1.msra.mxu0 0.0
  %614 = vmatprep.subr.mxu0 0.0
  %615 = vmatpush1.msra.mxu0 0.0
  %616 = vmatprep.subr.mxu0 0.0
  %617 = vmatpush1.msra.mxu0 0.0
  %618 = vmatprep.subr.mxu0 0.0
  %619 = vmatpush1.msra.mxu0 0.0
  %620 = vmatprep.subr.mxu0 0.0
  %621 = vmatpush1.msra.mxu0 0.0
  %622 = vmatprep.subr.mxu0 0.0
  %623 = vmatpush1.msra.mxu0 0.0
  %624 = vmatprep.subr.mxu0 0.0
  %625 = vmatpush1.msra.mxu0 0.0
  %626 = vmatprep.mubr.f32.mxu0 0.0
  %627 = vmatmul.mubr.f32.gmra.mrb[0].mxu0 %v557
  %v628 = vpop.f32.mrb[0].mxu0
  %v629 = vadd.f32 0.0, %v628
  %v630 = vpop.f32.mrb[0].mxu0
  %631 = vdwg.mxu0
  %v632 = vadd.f32 %v561, %v629
  %v633 = vtanh.pop %v632
  %s634 = scalar_lea.vmem %s2, 48
  %635 = vst [vmem:[%s634] sm:$0xff] %v633
  %s636 = scalar_lea.vmem %s0, 56
  %v637 = vld [vmem:[%s636] sm:$0xff]
  %638 = vmatprep.subr.mxu0 0.0
  %639 = vmatpush1.msra.mxu0 %v89
  %640 = vmatprep.subr.mxu0 0.0
  %641 = vmatpush1.msra.mxu0 %v90
  %642 = vmatprep.subr.mxu0 0.0
  %643 = vmatpush1.msra.mxu0 %v91
  %644 = vmatprep.subr.mxu0 0.0
  %645 = vmatpush1.msra.mxu0 %v92
  %646 = vmatprep.subr.mxu0 0.0
  %647 = vmatpush1.msra.mxu0 %v93
  %648 = vmatprep.subr.mxu0 0.0
  %649 = vmatpush1.msra.mxu0 %v94
  %650 = vmatprep.subr.mxu0 0.0
  %651 = vmatpush1.msra.mxu0 %v95
  %652 = vmatprep.subr.mxu0 0.0
  %653 = vmatpush1.msra.mxu0 %v96
  %654 = vmatprep.subr.mxu0 0.0
  %655 = vmatpush1.msra.mxu0 %v97
  %656 = vmatprep.subr.mxu0 0.0
  %657 = vmatpush1.msra.mxu0 %v98
  %658 = vmatprep.subr.mxu0 0.0
  %659 = vmatpush1.msra.mxu0 %v99
  %660 = vmatprep.subr.mxu0 0.0
  %661 = vmatpush1.msra.mxu0 %v100
  %662 = vmatprep.subr.mxu0 0.0
  %663 = vmatpush1.msra.mxu0 %v101
  %664 = vmatprep.subr.mxu0 0.0
  %665 = vmatpush1.msra.mxu0 %v102
  %666 = vmatprep.subr.mxu0 0.0
  %667 = vmatpush1.msra.mxu0 %v103
  %668 = vmatprep.subr.mxu0 0.0
  %669 = vmatpush1.msra.mxu0 %v104
  %670 = vmatprep.subr.mxu0 0.0
  %671 = vmatpush1.msra.mxu0 0.0
  %672 = vmatprep.subr.mxu0 0.0
  %673 = vmatpush1.msra.mxu0 0.0
  %674 = vmatprep.subr.mxu0 0.0
  %675 = vmatpush1.msra.mxu0 0.0
  %676 = vmatprep.subr.mxu0 0.0
  %677 = vmatpush1.msra.mxu0 0.0
  %678 = vmatprep.subr.mxu0 0.0
  %679 = vmatpush1.msra.mxu0 0.0
  %680 = vmatprep.subr.mxu0 0.0
  %681 = vmatpush1.msra.mxu0 0.0
  %682 = vmatprep.subr.mxu0 0.0
  %683 = vmatpush1.msra.mxu0 0.0
  %684 = vmatprep.subr.mxu0 0.0
  %685 = vmatpush1.msra.mxu0 0.0
  %686 = vmatprep.subr.mxu0 0.0
  %687 = vmatpush1.msra.mxu0 0.0
  %688 = vmatprep.subr.mxu0 0.0
  %689 = vmatpush1.msra.mxu0 0.0
  %690 = vmatprep.subr.mxu0 0.0
  %691 = vmatpush1.msra.mxu0 0.0
  %692 = vmatprep.subr.mxu0 0.0
  %693 = vmatpush1.msra.mxu0 0.0
  %694 = vmatprep.subr.mxu0 0.0
  %695 = vmatpush1.msra.mxu0 0.0
  %696 = vmatprep.subr.mxu0 0.0
  %697 = vmatpush1.msra.mxu0 0.0
  %698 = vmatprep.subr.mxu0 0.0
  %699 = vmatpush1.msra.mxu0 0.0
  %700 = vmatprep.subr.mxu0 0.0
  %701 = vmatpush1.msra.mxu0 0.0
  %702 = vmatprep.mubr.f32.mxu0 0.0
  %703 = vmatmul.mubr.f32.gmra.mrb[0].mxu0 %v633
  %v704 = vpop.f32.mrb[0].mxu0
  %v705 = vadd.f32 0.0, %v704
  %v706 = vpop.f32.mrb[0].mxu0
  %707 = vdwg.mxu0
  %v708 = vadd.f32 %v637, %v705
  %v709 = vtanh.pop %v708
  %s710 = scalar_lea.vmem %s2, 56
  %711 = vst [vmem:[%s710] sm:$0xff] %v709
  %712 = vst [vmem:[#allocation3] sm:$0xff] %v709
  // Predicated region
  $region44: #{rnn_sequence.1} parent=0 // pred_check
    _
  $region45: #{rnn_sequence.1} parent=0 // pred_check_branch
    %714 = sbr.rel (0) target = $region47
  $region46: #{rnn_sequence.1} parent=0 // pred_region
    _
  $region47: #{rnn_sequence.1} parent=0 // pred_fallthru
    _
  // Predicated region
  $region48: #{rnn_sequence.1} parent=0 // pred_check
    _
  $region49: #{rnn_sequence.1} parent=0 // pred_check_branch
    %716 = sbr.rel (0) target = $region51
  $region50: #{rnn_sequence.1} parent=0 // pred_region
    _
  $region51: #{rnn_sequence.1} parent=0 // pred_fallthru
    _
  %717 = vsyncmov [#allocation4]
  %s718 = vpop.sfrf %717
  %p719 = scmp.eq.s32.totalorder %s718, 0
  %p720 = pneg %p719
  %722 = shalt.err (%p720)

</llo_original>
